<compile_context>
chip_gen: v7x
topology: tpu7x:2x2x1
jax: 0.10.0
libtpu: 0.0.40
codegen_flags: <defaults>
</compile_context>

<pallas_src>
import functools

import jax
import jax.numpy as jnp
from jax.experimental import pallas as pl
from jax.experimental.pallas import tpu as pltpu


def _focal_loss_kernel(x_ref, t_ref, o_ref, *, alpha, gamma, tile_rows, lanes,
                       binary_targets):
    j = pl.program_id(1)

    @pl.when(j == 0)
    def _():
        o_ref[...] = jnp.zeros_like(o_ref)

    # Upcast in-kernel; inputs keep their original (possibly narrow) dtype
    # in HBM so DMA traffic stays minimal.
    p = x_ref[...].astype(jnp.float32)
    t = t_ref[...].astype(jnp.float32)

    if binary_targets:
        # Hard {0,1} labels: q == pt, single transcendental per element
        # (log) instead of three (log, log, exp).  Exact for hard labels.
        q = t * p + (1.0 - t) * (1.0 - p)
        bce = -jnp.maximum(jnp.log(q), -100.0)
        pt = q
    else:
        # torch binary_cross_entropy clamps log() at -100 (NaN-safe for the
        # ones-padded tail as well: 0 * -100, never 0 * -inf).
        log_p = jnp.maximum(jnp.log(p), -100.0)
        log_1mp = jnp.maximum(jnp.log(1.0 - p), -100.0)
        bce = -(t * log_p + (1.0 - t) * log_1mp)
        pt = jnp.exp(-bce)

    one_m_pt = 1.0 - pt

    # (1 - pt) ** gamma.  For integer gamma (module default gamma=2) use
    # explicit multiplies (exponentiation by squaring) instead of
    # pow == exp(gamma*log(x)), saving 2 EUP transcendentals per element.
    if float(gamma) == int(gamma) and int(gamma) >= 0:
        g = int(gamma)
        if g == 0:
            w = jnp.ones_like(one_m_pt)
        else:
            w = None
            base = one_m_pt
            while g:
                if g & 1:
                    w = base if w is None else w * base
                g >>= 1
                if g:
                    base = base * base
    else:
        w = one_m_pt ** jnp.float32(gamma)

    # Fold the weighting directly into the reduction input (fewer named
    # block-sized temporaries -> less vst pressure, esp. on v5e).
    f_loss = (alpha * w) * bce

    # Vector accumulation: (tile_rows, lanes) -> (8, lanes) with VPU adds,
    # accumulated into the VMEM-resident output block.  The single cross-lane
    # reduction to a scalar happens once, outside the kernel.
    o_ref[...] += jnp.sum(f_loss.reshape(tile_rows // 8, 8, lanes), axis=0)


def _vmem_capacity_bytes():
    """Best-effort query of per-core VMEM; conservative fallback (v7x)."""
    try:
        info = pltpu.get_tpu_info()
        cap = getattr(info, "vmem_capacity_bytes", None)
        if cap:
            return int(cap)
    except Exception:
        pass
    return 64 << 20


def focal_loss(inputs, targets, alpha=0.25, gamma=2.0, *,
               binary_targets=False, lanes=128):
    """Mean focal loss over all elements of `inputs` / `targets` (same shape).

    binary_targets=True enables an exact-for-hard-labels fast path
    (1 transcendental / element, bf16 targets in HBM).  Leave False for
    soft labels.
    """
    assert inputs.shape == targets.shape
    n = inputs.size

    # Keep original dtypes in HBM (no wrapper-side f32 upcast).
    x = inputs.reshape(-1)
    t = targets.reshape(-1)

    if binary_targets:
        # {0,1} is exactly representable in bf16: halves target HBM traffic.
        t = t.astype(jnp.bfloat16)

    # Sublane multiple: 16 keeps narrow (bf16) blocks on native tiles.
    narrow = (jnp.dtype(x.dtype).itemsize < 4) or (jnp.dtype(t.dtype).itemsize < 4)
    row_mult = 16 if narrow else 8

    itemsize = max(jnp.dtype(x.dtype).itemsize, jnp.dtype(t.dtype).itemsize)

    # Generation-aware block sizing: bigger blocks on 128 MiB-VMEM chips
    # (v5e/v6e), conservative on v7x (64 MiB per TC).
    cap = _vmem_capacity_bytes()
    if cap >= (96 << 20):
        target_block_bytes = 2 << 20
        vmem_limit = 64 << 20
    else:
        target_block_bytes = 1 << 20
        vmem_limit = 32 << 20

    rows0 = pl.cdiv(n, lanes)
    target_rows = max(row_mult,
                      (target_block_bytes // (lanes * itemsize) // row_mult) * row_mult)
    tile_rows = min(target_rows, pl.cdiv(rows0, row_mult) * row_mult)
    tile_rows = max(row_mult, (tile_rows // row_mult) * row_mult)

    def n_outer_for(tr):
        # Two partial sums on the parallel outer axis -> both v7x TCs can
        # work; sequential (harmless) on single-core v5e/v6e.
        return 2 if pl.cdiv(rows0, tr) >= 2 else 1

    def pad_waste(tr, no):
        unit = no * tr * lanes
        return (pl.cdiv(n, unit) * unit - n) / n

    n_outer = n_outer_for(tile_rows)
    # Padding-waste guard: don't DMA/compute a nearly-empty multi-MiB block.
    while tile_rows > row_mult and pad_waste(tile_rows, n_outer) > 0.10:
        tile_rows = max(row_mult, ((tile_rows // 2) // row_mult) * row_mult)
        n_outer = n_outer_for(tile_rows)
    if (n_outer == 2 and pad_waste(tile_rows, 2) > 0.10
            and pad_waste(tile_rows, 1) < pad_waste(tile_rows, 2)):
        n_outer = 1

    # Pad so the (n_outer, tiles_per_outer) grid covers the array exactly.
    # Pad with ONES: p=1, t=1 => bce=0, (1-pt)**gamma=0, contribution is 0,
    # so no in-kernel mask is needed at all.
    pad_unit = n_outer * tile_rows * lanes
    n_pad = pl.cdiv(n, pad_unit) * pad_unit
    if n_pad != n:
        x = jnp.pad(x, (0, n_pad - n), constant_values=1)
        t = jnp.pad(t, (0, n_pad - n), constant_values=1)

    rows = n_pad // lanes
    x2 = x.reshape(rows, lanes)
    t2 = t.reshape(rows, lanes)

    total_blocks = rows // tile_rows
    tiles_per_outer = total_blocks // n_outer

    kernel = functools.partial(
        _focal_loss_kernel,
        alpha=float(alpha), gamma=float(gamma),
        tile_rows=tile_rows, lanes=lanes,
        binary_targets=binary_targets)

    in_map = lambda o, j: (o * tiles_per_outer + j, 0)

    partials = pl.pallas_call(
        kernel,
        out_shape=jax.ShapeDtypeStruct((8 * n_outer, lanes), jnp.float32),
        grid_spec=pltpu.PrefetchScalarGridSpec(
            num_scalar_prefetch=0,
            grid=(n_outer, tiles_per_outer),
            in_specs=[
                pl.BlockSpec((tile_rows, lanes), in_map),
                pl.BlockSpec((tile_rows, lanes), in_map),
            ],
            out_specs=pl.BlockSpec((8, lanes), lambda o, j: (o, 0)),
        ),
        compiler_params=pltpu.CompilerParams(
            dimension_semantics=("parallel", "arbitrary"),
            vmem_limit_bytes=vmem_limit,
        ),
    )(x2, t2)

    # Single cross-lane reduction + mean normalization (tiny, done in XLA).
    return jnp.sum(partials) / jnp.float32(n)


def focal_loss_ref(inputs, targets, alpha=0.25, gamma=2.0):
    p = inputs.astype(jnp.float32)
    t = targets.astype(jnp.float32)
    log_p = jnp.maximum(jnp.log(p), -100.0)
    log_1mp = jnp.maximum(jnp.log(1.0 - p), -100.0)
    bce = -(t * log_p + (1.0 - t) * log_1mp)
    pt = jnp.exp(-bce)
    return jnp.mean(alpha * (1.0 - pt) ** gamma * bce)


if __name__ == "__main__":
    key = jax.random.PRNGKey(0)
    k1, k2 = jax.random.split(key)

    # Small NCHW-ish shape; inputs must be probabilities in (0, 1).
    shape = (2, 4, 16, 16)
    inputs = jax.nn.sigmoid(jax.random.normal(k1, shape, dtype=jnp.float32))
    targets = jax.random.bernoulli(k2, p=0.3, shape=shape).astype(jnp.float32)

    ref = focal_loss_ref(inputs, targets, alpha=0.25, gamma=2.0)

    # Exact (soft-label-safe) path.
    loss = jax.block_until_ready(focal_loss(inputs, targets, alpha=0.25, gamma=2.0))
    assert jnp.allclose(loss, ref, rtol=1e-5, atol=1e-6), (loss, ref)

    # Hard-label fast path (1 transcendental / element, bf16 targets in HBM).
    loss_fast = jax.block_until_ready(
        focal_loss(inputs, targets, alpha=0.25, gamma=2.0, binary_targets=True))
    assert jnp.allclose(loss_fast, ref, rtol=1e-5, atol=1e-6), (loss_fast, ref)

    print("KERNEL_OK")
</pallas_src>

<mosaic_0001>
module attributes {stable_mosaic.version = 11 : i64} {
  func.func @_focal_loss_kernel(%arg0: i32, %arg1: i32, %arg2: memref<16x128xf32, #tpu.memory_space<vmem>>, %arg3: memref<16x128xf32, #tpu.memory_space<vmem>>, %arg4: memref<8x128xf32, #tpu.memory_space<vmem>>) attributes {dimension_semantics = [#tpu.dimension_semantics<parallel>, #tpu.dimension_semantics<arbitrary>], iteration_bounds = array<i64: 1, 1>, scalar_prefetch = 0 : i64, scratch_operands = 0 : i64, tpu.core_type = #tpu.core_type<tc>, window_params = [{transform_indices = @transform_0, window_bounds = array<i64: 16, 128>}, {transform_indices = @transform_1, window_bounds = array<i64: 16, 128>}, {transform_indices = @transform_2, window_bounds = array<i64: 8, 128>}]} {
    %c0_i32 = arith.constant 0 : i32
    %0 = arith.cmpi eq, %arg1, %c0_i32 : i32
    %1 = arith.extui %0 : i1 to i32
    %c0_i32_0 = arith.constant 0 : i32
    %2 = arith.cmpi ne, %1, %c0_i32_0 : i32
    scf.if %2 {
      %cst_16 = arith.constant 0.000000e+00 : f32
      %34 = vector.broadcast %cst_16 : f32 to vector<8x128xf32>
      %c0_17 = arith.constant 0 : index
      %c0_18 = arith.constant 0 : index
      %35 = vector.load %arg4[%c0_17, %c0_18] : memref<8x128xf32, #tpu.memory_space<vmem>>, vector<8x128xf32>
      tpu.vector_store %arg4[%c0_17, %c0_18], %34 {strides = array<i32>} : memref<8x128xf32, #tpu.memory_space<vmem>>, vector<8x128xf32>,
    } else {
    }
    %c0 = arith.constant 0 : index
    %c0_1 = arith.constant 0 : index
    %3 = vector.load %arg2[%c0, %c0_1] : memref<16x128xf32, #tpu.memory_space<vmem>>, vector<16x128xf32>
    %c0_2 = arith.constant 0 : index
    %c0_3 = arith.constant 0 : index
    %4 = vector.load %arg3[%c0_2, %c0_3] : memref<16x128xf32, #tpu.memory_space<vmem>>, vector<16x128xf32>
    %5 = math.log %3 : vector<16x128xf32>
    %cst = arith.constant -1.000000e+02 : f32
    %6 = vector.broadcast %cst : f32 to vector<16x128xf32>
    %7 = arith.maximumf %5, %6 : vector<16x128xf32>
    %cst_4 = arith.constant 1.000000e+00 : f32
    %8 = vector.broadcast %cst_4 : f32 to vector<16x128xf32>
    %9 = arith.subf %8, %3 : vector<16x128xf32>
    %10 = math.log %9 : vector<16x128xf32>
    %cst_5 = arith.constant -1.000000e+02 : f32
    %11 = vector.broadcast %cst_5 : f32 to vector<16x128xf32>
    %12 = arith.maximumf %10, %11 : vector<16x128xf32>
    %13 = arith.mulf %4, %7 : vector<16x128xf32>
    %cst_6 = arith.constant 1.000000e+00 : f32
    %14 = vector.broadcast %cst_6 : f32 to vector<16x128xf32>
    %15 = arith.subf %14, %4 : vector<16x128xf32>
    %16 = arith.mulf %15, %12 : vector<16x128xf32>
    %17 = arith.addf %13, %16 : vector<16x128xf32>
    %cst_7 = arith.constant 0.000000e+00 : f32
    %18 = vector.broadcast %cst_7 : f32 to vector<16x128xf32>
    %19 = arith.subf %18, %17 : vector<16x128xf32>
    %cst_8 = arith.constant 0.000000e+00 : f32
    %20 = vector.broadcast %cst_8 : f32 to vector<16x128xf32>
    %21 = arith.subf %20, %19 : vector<16x128xf32>
    %22 = math.exp %21 : vector<16x128xf32>
    %cst_9 = arith.constant 1.000000e+00 : f32
    %23 = vector.broadcast %cst_9 : f32 to vector<16x128xf32>
    %24 = arith.subf %23, %22 : vector<16x128xf32>
    %25 = arith.mulf %24, %24 : vector<16x128xf32>
    %cst_10 = arith.constant 2.500000e-01 : f32
    %26 = vector.broadcast %cst_10 : f32 to vector<16x128xf32>
    %27 = arith.mulf %26, %25 : vector<16x128xf32>
    %28 = arith.mulf %27, %19 : vector<16x128xf32>
    %c0_11 = arith.constant 0 : index
    %c0_12 = arith.constant 0 : index
    %29 = vector.load %arg4[%c0_11, %c0_12] : memref<8x128xf32, #tpu.memory_space<vmem>>, vector<8x128xf32>
    %30 = vector.shape_cast %28 : vector<16x128xf32> to vector<2x8x128xf32>
    %cst_13 = arith.constant dense<0.000000e+00> : vector<8x128xf32>
    %31 = vector.multi_reduction <add>, %30, %cst_13 [0] : vector<2x8x128xf32> to vector<8x128xf32>
    %32 = arith.addf %29, %31 : vector<8x128xf32>
    %c0_14 = arith.constant 0 : index
    %c0_15 = arith.constant 0 : index
    %33 = vector.load %arg4[%c0_14, %c0_15] : memref<8x128xf32, #tpu.memory_space<vmem>>, vector<8x128xf32>
    tpu.vector_store %arg4[%c0_14, %c0_15], %32 {strides = array<i32>} : memref<8x128xf32, #tpu.memory_space<vmem>>, vector<8x128xf32>,
    return
  }
  func.func @transform_0(%arg0: i32, %arg1: i32) -> (i32, i32) {
    %c1_i32 = arith.constant 1 : i32
    %0 = arith.muli %arg0, %c1_i32 : i32
    %1 = arith.addi %0, %arg1 : i32
    %c0_i32 = arith.constant 0 : i32
    %c0_i32_0 = arith.constant 0 : i32
    return %1, %c0_i32 : i32, i32
  }
  func.func @transform_1(%arg0: i32, %arg1: i32) -> (i32, i32) {
    %c1_i32 = arith.constant 1 : i32
    %0 = arith.muli %arg0, %c1_i32 : i32
    %1 = arith.addi %0, %arg1 : i32
    %c0_i32 = arith.constant 0 : i32
    %c0_i32_0 = arith.constant 0 : i32
    return %1, %c0_i32 : i32, i32
  }
  func.func @transform_2(%arg0: i32, %arg1: i32) -> (i32, i32) {
    %c0_i32 = arith.constant 0 : i32
    %c0_i32_0 = arith.constant 0 : i32
    return %arg0, %c0_i32 : i32, i32
  }
}

</mosaic_0001>

<llo_original>
// kernel: tpu_custom_call.1
$region0: #{tpu_custom_call.1}
  #allocation0 [shape = 'u32[]', space=smem, size = 0x4, offset = 0x4, fixed_abs, tag = 'smem constant byte address 0x4 - core index']
  #allocation1 [shape = 'u32[144,128]{1,0:T(1,128)}', space=vmem, size = 0x12000, scoped, tag = 'internal scratch']
  %s0 = inlined_call_operand.hbm [shape: f32[16,128], index: 0, kind: input, shape index: {}]
  %s1 = inlined_call_operand.hbm [shape: f32[16,128], index: 1, kind: input, shape index: {}]
  %s2 = inlined_call_operand.hbm [shape: f32[8,128], index: 2, kind: output, shape index: {}]
  %s3 = sld [smem:[#allocation0]]
  $region30: #{tpu_custom_call.1} parent=0
    _
  %s5 = ssub.s32 1, %s3
  %s6 = scalar_select 0, %s5, %s3
  $region1: #{tpu_custom_call.1} parent=0
    #allocation2 [shape = 'u8[8192]{0}', space=vmem, size = 0x2000, scoped, tag = 'input window, operand 0, single buffered']
    #allocation3 [shape = 's32[1]{0}', space=sflag, size = 0x4, scoped, tag = 'scoped memory for tpu_custom_call.1']
    #allocation4 [shape = 's32[1]{0}', space=sflag, size = 0x4, scoped, tag = 'scoped memory for tpu_custom_call.1']
    #allocation5 [shape = 'u8[8192]{0}', space=vmem, size = 0x2000, scoped, tag = 'input window, operand 1, single buffered']
    #allocation6 [shape = 's32[1]{0}', space=sflag, size = 0x4, scoped, tag = 'scoped memory for tpu_custom_call.1']
    #allocation7 [shape = 'u8[4096]{0}', space=vmem, size = 0x1000, scoped, tag = 'output window, operand 0, single buffered']
    %7 = vsyncpa [#allocation3], 0
    %8 = vsyncpa [#allocation6], 0
    %9 = vsyncpa [#allocation4], 0
    // Predicated region
    $region2: #{tpu_custom_call.1} parent=1 // pred_check
      _
    $region3: #{tpu_custom_call.1} parent=1 // pred_check_branch
      %11 = sbr.rel (0) target = $region5
    $region4: #{tpu_custom_call.1} parent=1 // pred_region
      %s12 = sadd.s32 0, 0
      %s13 = smul.u32 2, %s12
      %s15 = ssub.s32 256, 256
      %16 = vsyncadd [#allocation3], %s15
      %s17 = smul.addr %s13, 128
      %s18 = scalar_lea.hbm %s0, %s17
      %s19 = sshll.u32 [#allocation2], 4
      %s20 = int_to_ptr.vmem [resolvable:$true] %s19
      %25 = dma.hbm_to_vmem [thread:$0]  %s18, 256, %s20, [#allocation3], 128, 128, 8
    $region5: #{tpu_custom_call.1} parent=1 // pred_fallthru
      _
    // Predicated region
    $region6: #{tpu_custom_call.1} parent=1 // pred_check
      _
    $region7: #{tpu_custom_call.1} parent=1 // pred_check_branch
      %27 = sbr.rel (0) target = $region9
    $region8: #{tpu_custom_call.1} parent=1 // pred_region
      %s28 = sadd.s32 0, 0
      %s29 = smul.u32 2, %s28
      %s31 = ssub.s32 256, 256
      %32 = vsyncadd [#allocation6], %s31
      %s33 = smul.addr %s29, 128
      %s34 = scalar_lea.hbm %s1, %s33
      %s35 = sshll.u32 [#allocation5], 4
      %s36 = int_to_ptr.vmem [resolvable:$true] %s35
      %41 = dma.hbm_to_vmem [thread:$0]  %s34, 256, %s36, [#allocation6], 128, 128, 8
    $region9: #{tpu_custom_call.1} parent=1 // pred_fallthru
      _
    // Predicated region
    $region10: #{tpu_custom_call.1} parent=1 // pred_check
      _
    $region11: #{tpu_custom_call.1} parent=1 // pred_check_branch
      %43 = sbr.rel (0) target = $region13
    $region12: #{tpu_custom_call.1} parent=1 // pred_region
      %44 = dma.done [#allocation3], 256
    $region13: #{tpu_custom_call.1} parent=1 // pred_fallthru
      _
    // Predicated region
    $region14: #{tpu_custom_call.1} parent=1 // pred_check
      _
    $region15: #{tpu_custom_call.1} parent=1 // pred_check_branch
      %46 = sbr.rel (0) target = $region17
    $region16: #{tpu_custom_call.1} parent=1 // pred_region
      %47 = dma.done [#allocation6], 256
    $region17: #{tpu_custom_call.1} parent=1 // pred_fallthru
      _
    %s48 = sadd.s32 0, 0
    %s49 = smul.u32 2, %s48
    %s50 = sadd.s32 0, 0
    %s51 = smul.u32 2, %s50
    %p52 = scmp.eq.s32.totalorder 0, 0
    // Predicated region
    $region18: #{tpu_custom_call.1} parent=1 // pred_check
      %p53 = pneg %p52
    $region19: #{tpu_custom_call.1} parent=1 // pred_check_branch
      %55 = sbr.rel (%p53) target = $region21
    $region20: #{tpu_custom_call.1} parent=1 // pred_region
      %56 = vst [vmem:[#allocation7] sm:$0xff] 0.0
    $region21: #{tpu_custom_call.1} parent=1 // pred_fallthru
      _
    %v57 = vld [vmem:[#allocation2] sm:$0xff]
    %v58 = vld [vmem:[#allocation2 + $0x8] sm:$0xff]
    %v59 = vld [vmem:[#allocation5] sm:$0xff]
    %v60 = vld [vmem:[#allocation5 + $0x8] sm:$0xff]
    %v61 = vlog2.pop %v57
    %v62 = vmul.f32 %v61, 0.6931472
    %v63 = vlog2.pop %v58
    %v64 = vmul.f32 %v63, 0.6931472
    %v65 = vmax.f32 %v62, -100.0
    %v66 = vmax.f32 %v64, -100.0
    %v67 = vsub.f32 1.0, %v57
    %v68 = vsub.f32 1.0, %v58
    %v69 = vlog2.pop %v67
    %v70 = vmul.f32 %v69, 0.6931472
    %v71 = vlog2.pop %v68
    %v72 = vmul.f32 %v71, 0.6931472
    %v73 = vmax.f32 %v70, -100.0
    %v74 = vmax.f32 %v72, -100.0
    %v75 = vmul.f32 %v59, %v65
    %v76 = vmul.f32 %v60, %v66
    %v77 = vsub.f32 1.0, %v59
    %v78 = vsub.f32 1.0, %v60
    %v79 = vmul.f32 %v77, %v73
    %v80 = vmul.f32 %v78, %v74
    %v81 = vadd.f32 %v75, %v79
    %v82 = vadd.f32 %v76, %v80
    %v83 = vsub.f32 0.0, %v81
    %v84 = vsub.f32 0.0, %v82
    %v85 = vsub.f32 0.0, %v83
    %v86 = vsub.f32 0.0, %v84
    %v87 = vmul.f32 %v85, 1.442695
    %v88 = vpow.pop %v87
    %v89 = vmul.f32 %v86, 1.442695
    %v90 = vpow.pop %v89
    %v91 = vsub.f32 1.0, %v88
    %v92 = vsub.f32 1.0, %v90
    %v93 = vmul.f32 %v91, %v91
    %v94 = vmul.f32 %v92, %v92
    %v95 = vmul.f32 %v93, 0.25
    %v96 = vmul.f32 %v94, 0.25
    %v97 = vmul.f32 %v95, %v83
    %v98 = vmul.f32 %v96, %v84
    %v99 = vld [vmem:[#allocation7] sm:$0xff]
    %v100 = vadd.f32 %v97, %v98
    %v101 = vadd.f32 %v99, %v100
    %102 = vst [vmem:[#allocation7] sm:$0xff] %v101
    // Predicated region
    $region22: #{tpu_custom_call.1} parent=1 // pred_check
      _
    $region23: #{tpu_custom_call.1} parent=1 // pred_check_branch
      %104 = sbr.rel (0) target = $region25
    $region24: #{tpu_custom_call.1} parent=1 // pred_region
      %s106 = ssub.s32 128, 128
      %107 = vsyncadd [#allocation4], %s106
      %s109 = sshll.u32 [#allocation7], 4
      %s110 = int_to_ptr.vmem [resolvable:$true] %s109
      %112 = dma.vmem_to_hbm [thread:$0]  %s110, 128, %s2, [#allocation4]
    $region25: #{tpu_custom_call.1} parent=1 // pred_fallthru
      _
    // Predicated region
    $region26: #{tpu_custom_call.1} parent=1 // pred_check
      _
    $region27: #{tpu_custom_call.1} parent=1 // pred_check_branch
      %114 = sbr.rel (0) target = $region29
    $region28: #{tpu_custom_call.1} parent=1 // pred_region
      %115 = dma.done [#allocation4], 128
    $region29: #{tpu_custom_call.1} parent=1 // pred_fallthru
      _
    %116 = vsyncpa [#allocation3], 1
    %117 = vsyncpa [#allocation6], 1
    %118 = vsyncpa [#allocation4], 1

</llo_original>
